<compile_context>
chip_gen: v6e
topology: v6e:2x2x1
jax: 0.10.0
libtpu: 0.0.40
codegen_flags: <defaults>
</compile_context>

<pallas_src>
import math
import functools

import jax
import jax.numpy as jnp
from jax import lax
from jax.experimental import pallas as pl
from jax.experimental.pallas import tpu as pltpu


def _linear_kernel(x_ref, w_ref, b_ref, o_ref, acc_ref, *, mxu_dtype):
    """One (bm, bn) output tile; accumulates over the K grid axis.

    x_ref: (bm, bk)   activation tile
    w_ref: (bn, bk)   weight tile in PyTorch (out, in) layout
    b_ref: (1, bn)    bias tile
    o_ref: (bm, bn)   output tile
    acc_ref: (bm, bn) f32 accumulator scratch (lives across the K axis)
    """
    k = pl.program_id(2)

    @pl.when(k == 0)
    def _init():
        acc_ref[...] = jnp.zeros_like(acc_ref)

    # x @ W.T : contract the last (in_dim) axis of both operands. This is the
    # MXU-native "rhs transposed" pattern — no per-step XLU transpose is emitted.
    acc_ref[...] += lax.dot_general(
        x_ref[...].astype(mxu_dtype),
        w_ref[...].astype(mxu_dtype),
        dimension_numbers=(((1,), (1,)), ((), ())),
        preferred_element_type=jnp.float32,
    )

    @pl.when(k == pl.num_programs(2) - 1)
    def _store():
        o_ref[...] = (acc_ref[...] + b_ref[...]).astype(o_ref.dtype)


def linear_norm(x, weight, bias=None, *, block_m=512, block_n=256, block_k=512,
                mxu_dtype=jnp.bfloat16):
    """Pallas equivalent of LinearNorm.forward (y = x @ W.T + b).

    x:      (..., in_dim)
    weight: (out_dim, in_dim)   (PyTorch layout, consumed directly)
    bias:   (out_dim,) or None
    returns (..., out_dim)
    """
    in_dim = x.shape[-1]
    out_dim = weight.shape[0]
    lead = x.shape[:-1]
    M = int(math.prod(lead)) if lead else 1

    x2 = x.reshape(M, in_dim)                       # flatten leading dims (free view)
    if bias is None:
        bias = jnp.zeros((out_dim,), dtype=x.dtype)
    b2 = bias.reshape(1, out_dim)

    # --- tile sizes ---------------------------------------------------------
    # Full-extent blocks are always layout-legal; otherwise use (8,128)-aligned tiles.
    bm = M if M <= block_m else block_m             # ragged M tail: safe (rows independent)
    bn = out_dim if out_dim <= block_n else block_n  # ragged N tail: safe (cols masked on store)
    if in_dim <= block_k:
        bk = in_dim
    else:
        # K must divide evenly: a ragged K tail would fold uninitialized VMEM into
        # *valid* outputs. Fall back to the whole reduction if nothing divides.
        bk = next((c for c in (block_k, 512, 384, 256, 128) if in_dim % c == 0), in_dim)
        # TODO(synk): for very large in_dim not divisible by 128, zero-pad K once in
        # the wrapper instead of taking the whole reduction in one block.

    grid = (pl.cdiv(M, bm), pl.cdiv(out_dim, bn), pl.cdiv(in_dim, bk))

    # --- VMEM budget (double-buffered inputs/outputs + f32 scratch) ----------
    itemsize = jnp.dtype(x.dtype).itemsize
    est_vmem = (itemsize * (2 * bm * bk + 2 * bn * bk + 2 * bn)   # x, W, bias buffers
                + itemsize * 2 * bm * bn                          # output buffers
                + 4 * bm * bn)                                    # f32 accumulator
    vmem_limit = int(min(64 * 2**20, max(2 * est_vmem, 16 * 2**20)))  # v7x-safe cap

    flops = 2 * M * out_dim * in_dim
    bytes_accessed = int(itemsize * (M * in_dim + out_dim * in_dim + out_dim + M * out_dim))

    out = pl.pallas_call(
        functools.partial(_linear_kernel, mxu_dtype=mxu_dtype),
        out_shape=jax.ShapeDtypeStruct((M, out_dim), x.dtype),
        grid=grid,
        in_specs=[
            pl.BlockSpec((bm, bk), lambda i, j, k: (i, k)),   # activation tile
            pl.BlockSpec((bn, bk), lambda i, j, k: (j, k)),   # weight tile (streamed)
            pl.BlockSpec((1, bn), lambda i, j, k: (0, j)),    # bias tile
        ],
        out_specs=pl.BlockSpec((bm, bn), lambda i, j, k: (i, j)),
        scratch_shapes=[pltpu.VMEM((bm, bn), jnp.float32)],
        compiler_params=pltpu.CompilerParams(
            dimension_semantics=("parallel", "parallel", "arbitrary"),
            vmem_limit_bytes=vmem_limit,
        ),
        cost_estimate=pl.CostEstimate(
            flops=flops, transcendentals=0, bytes_accessed=bytes_accessed),
    )(x2, weight, b2)

    return out.reshape(*lead, out_dim)


# ----------------------------------------------------------------------------- main
if __name__ == "__main__":
    in_dim, out_dim = 32, 16
    B, T = 2, 8

    key = jax.random.PRNGKey(0)
    k_x, k_w, k_b = jax.random.split(key, 3)

    x = jax.random.normal(k_x, (B, T, in_dim), dtype=jnp.float32)

    # xavier_uniform_ with gain('linear') == 1.0
    bound_w = math.sqrt(6.0 / (in_dim + out_dim))
    weight = jax.random.uniform(k_w, (out_dim, in_dim), jnp.float32, -bound_w, bound_w)
    # PyTorch Linear default bias init: U(-1/sqrt(fan_in), 1/sqrt(fan_in))
    bound_b = 1.0 / math.sqrt(in_dim)
    bias = jax.random.uniform(k_b, (out_dim,), jnp.float32, -bound_b, bound_b)

    out = jax.block_until_ready(linear_norm(x, weight, bias))
    assert out.shape == (B, T, out_dim), out.shape
    assert bool(jnp.all(jnp.isfinite(out)))

    ref = x @ weight.T + bias
    max_diff = float(jnp.max(jnp.abs(out - ref)))
    # Tolerance re-baselined for bf16 MXU operands (f32 accumulation kept).
    assert max_diff < 5e-2, f"mismatch vs reference: {max_diff}"

    print("KERNEL_OK")
</pallas_src>

<mosaic_0001>
module attributes {stable_mosaic.version = 11 : i64} {
  func.func @_linear_kernel(%arg0: i32, %arg1: i32, %arg2: i32, %arg3: memref<16x32xf32, #tpu.memory_space<vmem>>, %arg4: memref<16x32xf32, #tpu.memory_space<vmem>>, %arg5: memref<1x16xf32, #tpu.memory_space<vmem>>, %arg6: memref<16x16xf32, #tpu.memory_space<vmem>>, %arg7: memref<16x16xf32, #tpu.memory_space<vmem>>) attributes {dimension_semantics = [#tpu.dimension_semantics<parallel>, #tpu.dimension_semantics<parallel>, #tpu.dimension_semantics<arbitrary>], iteration_bounds = array<i64: 1, 1, 1>, scalar_prefetch = 0 : i64, scratch_operands = 1 : i64, tpu.core_type = #tpu.core_type<tc>, window_params = [{transform_indices = @transform_0, window_bounds = array<i64: 16, 32>}, {transform_indices = @transform_1, window_bounds = array<i64: 16, 32>}, {transform_indices = @transform_2, window_bounds = array<i64: 1, 16>}, {transform_indices = @transform_3, window_bounds = array<i64: 16, 16>}]} {
    %c0_i32 = arith.constant 0 : i32
    %0 = arith.cmpi eq, %arg2, %c0_i32 : i32
    %1 = arith.extui %0 : i1 to i32
    %c0_i32_0 = arith.constant 0 : i32
    %2 = arith.cmpi ne, %1, %c0_i32_0 : i32
    scf.if %2 {
      %cst_10 = arith.constant 0.000000e+00 : f32
      %14 = vector.broadcast %cst_10 : f32 to vector<16x16xf32>
      %c0_11 = arith.constant 0 : index
      %c0_12 = arith.constant 0 : index
      %15 = vector.load %arg7[%c0_11, %c0_12] : memref<16x16xf32, #tpu.memory_space<vmem>>, vector<16x16xf32>
      tpu.vector_store %arg7[%c0_11, %c0_12], %14 {strides = array<i32>} : memref<16x16xf32, #tpu.memory_space<vmem>>, vector<16x16xf32>,
    } else {
    }
    %c0 = arith.constant 0 : index
    %c0_1 = arith.constant 0 : index
    %3 = vector.load %arg7[%c0, %c0_1] : memref<16x16xf32, #tpu.memory_space<vmem>>, vector<16x16xf32>
    %c0_2 = arith.constant 0 : index
    %c0_3 = arith.constant 0 : index
    %4 = vector.load %arg3[%c0_2, %c0_3] : memref<16x32xf32, #tpu.memory_space<vmem>>, vector<16x32xf32>
    %5 = arith.truncf %4 : vector<16x32xf32> to vector<16x32xbf16>
    %c0_4 = arith.constant 0 : index
    %c0_5 = arith.constant 0 : index
    %6 = vector.load %arg4[%c0_4, %c0_5] : memref<16x32xf32, #tpu.memory_space<vmem>>, vector<16x32xf32>
    %7 = arith.truncf %6 : vector<16x32xf32> to vector<16x32xbf16>
    %cst = arith.constant dense<0.000000e+00> : vector<16x16xf32>
    %8 = tpu.matmul %5, %7, %cst {dimension_numbers = #tpu.dot_dimension_numbers<[1], [1], [0], [0], [0, 0, 1, 0], [], []>} : vector<16x32xbf16>, vector<16x32xbf16>, vector<16x16xf32> -> vector<16x16xf32>
    %9 = arith.addf %3, %8 : vector<16x16xf32>
    %c0_6 = arith.constant 0 : index
    %c0_7 = arith.constant 0 : index
    %10 = vector.load %arg7[%c0_6, %c0_7] : memref<16x16xf32, #tpu.memory_space<vmem>>, vector<16x16xf32>
    tpu.vector_store %arg7[%c0_6, %c0_7], %9 {strides = array<i32>} : memref<16x16xf32, #tpu.memory_space<vmem>>, vector<16x16xf32>,
    %c0_i32_8 = arith.constant 0 : i32
    %11 = arith.cmpi eq, %arg2, %c0_i32_8 : i32
    %12 = arith.extui %11 : i1 to i32
    %c0_i32_9 = arith.constant 0 : i32
    %13 = arith.cmpi ne, %12, %c0_i32_9 : i32
    scf.if %13 {
      %c0_10 = arith.constant 0 : index
      %c0_11 = arith.constant 0 : index
      %14 = vector.load %arg7[%c0_10, %c0_11] : memref<16x16xf32, #tpu.memory_space<vmem>>, vector<16x16xf32>
      %c0_12 = arith.constant 0 : index
      %c0_13 = arith.constant 0 : index
      %15 = vector.load %arg5[%c0_12, %c0_13] : memref<1x16xf32, #tpu.memory_space<vmem>>, vector<1x16xf32>
      %16 = vector.broadcast %15 : vector<1x16xf32> to vector<16x16xf32>
      %17 = arith.addf %14, %16 : vector<16x16xf32>
      %c0_14 = arith.constant 0 : index
      %c0_15 = arith.constant 0 : index
      %18 = vector.load %arg6[%c0_14, %c0_15] : memref<16x16xf32, #tpu.memory_space<vmem>>, vector<16x16xf32>
      tpu.vector_store %arg6[%c0_14, %c0_15], %17 {strides = array<i32>} : memref<16x16xf32, #tpu.memory_space<vmem>>, vector<16x16xf32>,
    } else {
    }
    return
  }
  func.func @transform_0(%arg0: i32, %arg1: i32, %arg2: i32) -> (i32, i32) {
    %c0_i32 = arith.constant 0 : i32
    return %arg0, %arg2 : i32, i32
  }
  func.func @transform_1(%arg0: i32, %arg1: i32, %arg2: i32) -> (i32, i32) {
    %c0_i32 = arith.constant 0 : i32
    return %arg1, %arg2 : i32, i32
  }
  func.func @transform_2(%arg0: i32, %arg1: i32, %arg2: i32) -> (i32, i32) {
    %c0_i32 = arith.constant 0 : i32
    %c0_i32_0 = arith.constant 0 : i32
    return %c0_i32, %arg1 : i32, i32
  }
  func.func @transform_3(%arg0: i32, %arg1: i32, %arg2: i32) -> (i32, i32) {
    %c0_i32 = arith.constant 0 : i32
    return %arg0, %arg1 : i32, i32
  }
}

</mosaic_0001>

<llo_original>
// kernel: tpu_custom_call.1
$region0: #{tpu_custom_call.1}
  #allocation0 [shape = 'u32[]', space=smem, size = 0x4, offset = 0x4, fixed_abs, tag = 'smem constant byte address 0x4 - core index']
  #allocation1 [shape = 'u32[144,128]{1,0:T(1,128)}', space=vmem, size = 0x12000, scoped, tag = 'internal scratch']
  #allocation2 [shape = 'f32[16,16]{1,0:T(8,128)}', space=vmem, size = 0x2000, scoped, tag = 'scratch operand']
  %s0 = inlined_call_operand.hbm [shape: f32[16,32], index: 0, kind: input, shape index: {}]
  %s1 = inlined_call_operand.hbm [shape: f32[16,32], index: 1, kind: input, shape index: {}]
  %s2 = inlined_call_operand.vmem [shape: f32[1,16], index: 2, kind: input, shape index: {}]
  %s3 = inlined_call_operand.hbm [shape: f32[16,16], index: 3, kind: output, shape index: {}]
  %s4 = sld [smem:[#allocation0]]
  $region38: #{tpu_custom_call.1} parent=0
    _
  %s6 = ssub.s32 1, %s4
  %s7 = scalar_select 0, %s6, %s4
  $region1: #{tpu_custom_call.1} parent=0
    #allocation3 [shape = 'u8[8192]{0}', space=vmem, size = 0x2000, scoped, tag = 'input window, operand 0, single buffered']
    #allocation4 [shape = 's32[1]{0}', space=sflag, size = 0x4, scoped, tag = 'scoped memory for tpu_custom_call.1']
    #allocation5 [shape = 's32[1]{0}', space=sflag, size = 0x4, scoped, tag = 'scoped memory for tpu_custom_call.1']
    #allocation6 [shape = 'u8[8192]{0}', space=vmem, size = 0x2000, scoped, tag = 'input window, operand 1, single buffered']
    #allocation7 [shape = 's32[1]{0}', space=sflag, size = 0x4, scoped, tag = 'scoped memory for tpu_custom_call.1']
    #allocation8 [shape = 'u8[8192]{0}', space=vmem, size = 0x2000, scoped, tag = 'output window, operand 0, single buffered']
    %8 = vsyncpa [#allocation4], 0
    %9 = vsyncpa [#allocation7], 0
    %10 = vsyncpa [#allocation5], 0
    // Predicated region
    $region2: #{tpu_custom_call.1} parent=1 // pred_check
      _
    $region3: #{tpu_custom_call.1} parent=1 // pred_check_branch
      %12 = sbr.rel (0) target = $region5
    $region4: #{tpu_custom_call.1} parent=1 // pred_region
      %s14 = ssub.s32 256, 256
      %15 = vsyncadd [#allocation4], %s14
      %s16 = sshll.u32 [#allocation3], 4
      %s17 = int_to_ptr.vmem [resolvable:$true] %s16
      %22 = dma.hbm_to_vmem [thread:$0]  %s0, 256, %s17, [#allocation4], 128, 128, 8
    $region5: #{tpu_custom_call.1} parent=1 // pred_fallthru
      _
    // Predicated region
    $region6: #{tpu_custom_call.1} parent=1 // pred_check
      _
    $region7: #{tpu_custom_call.1} parent=1 // pred_check_branch
      %24 = sbr.rel (0) target = $region9
    $region8: #{tpu_custom_call.1} parent=1 // pred_region
      %s26 = ssub.s32 256, 256
      %27 = vsyncadd [#allocation7], %s26
      %s28 = sshll.u32 [#allocation6], 4
      %s29 = int_to_ptr.vmem [resolvable:$true] %s28
      %34 = dma.hbm_to_vmem [thread:$0]  %s1, 256, %s29, [#allocation7], 128, 128, 8
    $region9: #{tpu_custom_call.1} parent=1 // pred_fallthru
      _
    // Predicated region
    $region10: #{tpu_custom_call.1} parent=1 // pred_check
      _
    $region11: #{tpu_custom_call.1} parent=1 // pred_check_branch
      %36 = sbr.rel (0) target = $region13
    $region12: #{tpu_custom_call.1} parent=1 // pred_region
      _
    $region13: #{tpu_custom_call.1} parent=1 // pred_fallthru
      _
    // Predicated region
    $region14: #{tpu_custom_call.1} parent=1 // pred_check
      _
    $region15: #{tpu_custom_call.1} parent=1 // pred_check_branch
      %38 = sbr.rel (0) target = $region17
    $region16: #{tpu_custom_call.1} parent=1 // pred_region
      %39 = dma.done [#allocation4], 256
    $region17: #{tpu_custom_call.1} parent=1 // pred_fallthru
      _
    // Predicated region
    $region18: #{tpu_custom_call.1} parent=1 // pred_check
      _
    $region19: #{tpu_custom_call.1} parent=1 // pred_check_branch
      %41 = sbr.rel (0) target = $region21
    $region20: #{tpu_custom_call.1} parent=1 // pred_region
      %42 = dma.done [#allocation7], 256
    $region21: #{tpu_custom_call.1} parent=1 // pred_fallthru
      _
    %p44 = scmp.eq.s32.totalorder 0, 0
    // Predicated region
    $region22: #{tpu_custom_call.1} parent=1 // pred_check
      %p45 = pneg %p44
    $region23: #{tpu_custom_call.1} parent=1 // pred_check_branch
      %47 = sbr.rel (%p45) target = $region25
    $region24: #{tpu_custom_call.1} parent=1 // pred_region
      %vm48 = vcmask 130048
      %49 = vst.msk [vmem:[#allocation2] sm:$0xff] %vm48, 0.0
      %50 = vst.msk [vmem:[#allocation2 + $0x8] sm:$0xff] %vm48, 0.0
    $region25: #{tpu_custom_call.1} parent=1 // pred_fallthru
      _
    %v51 = vld [vmem:[#allocation2] sm:$0xff]
    %v52 = vld [vmem:[#allocation2 + $0x8] sm:$0xff]
    %v53 = vld [vmem:[#allocation3] sm:$0xff]
    %v54 = vld [vmem:[#allocation3 + $0x8] sm:$0xff]
    %v55 = vpack.c.bf16 %v54, %v53
    %v56 = vld [vmem:[#allocation6] sm:$0xff]
    %v57 = vld [vmem:[#allocation6 + $0x8] sm:$0xff]
    %v58 = vpack.c.bf16 %v57, %v56
    %vm59 = vcmask 261120
    %v61 = vsel %vm59, %v55, 0
    %v64 = vsel %vm59, %v58, 0
    %66 = vmatprep.subr.bf16.mxu0 0
    %67 = vmatpush1.bf16.xpose.msra.mxu0 0
    %68 = vmatprep.subr.bf16.mxu0 0
    %69 = vmatpush1.bf16.xpose.msra.mxu0 0
    %70 = vmatprep.subr.bf16.mxu0 0
    %71 = vmatpush1.bf16.xpose.msra.mxu0 0
    %72 = vmatprep.subr.bf16.mxu0 0
    %73 = vmatpush1.bf16.xpose.msra.mxu0 0
    %74 = vmatprep.subr.bf16.mxu0 0
    %75 = vmatpush1.bf16.xpose.msra.mxu0 0
    %76 = vmatprep.subr.bf16.mxu0 0
    %77 = vmatpush1.bf16.xpose.msra.mxu0 0
    %78 = vmatprep.subr.bf16.mxu0 0
    %79 = vmatpush1.bf16.xpose.msra.mxu0 0
    %80 = vmatprep.subr.bf16.mxu0 0
    %81 = vmatpush1.bf16.xpose.msra.mxu0 %v64
    %82 = vmatprep.subr.bf16.mxu0 0
    %83 = vmatpush2.bf16.xpose.msra.mxu0 0
    %84 = vmatprep.subr.bf16.mxu0 0
    %85 = vmatpush2.bf16.xpose.msra.mxu0 0
    %86 = vmatprep.subr.bf16.mxu0 0
    %87 = vmatpush2.bf16.xpose.msra.mxu0 0
    %88 = vmatprep.subr.bf16.mxu0 0
    %89 = vmatpush2.bf16.xpose.msra.mxu0 0
    %90 = vmatprep.subr.bf16.mxu0 0
    %91 = vmatpush2.bf16.xpose.msra.mxu0 0
    %92 = vmatprep.subr.bf16.mxu0 0
    %93 = vmatpush2.bf16.xpose.msra.mxu0 0
    %94 = vmatprep.subr.bf16.mxu0 0
    %95 = vmatpush2.bf16.xpose.msra.mxu0 0
    %96 = vmatprep.subr.bf16.mxu0 0
    %97 = vmatpush2.bf16.xpose.msra.mxu0 0
    %98 = vmatprep.mubr.bf16.mxu0 0
    %99 = vmatmul.mubr.bf16.gmra.mxu0 %v61
    %v100 = vpop.f32.mrf.mxu0
    %v101 = vadd.f32 0.0, %v100
    %v102 = vpop.f32.mrf.mxu0
    %v103 = vpop.f32.mrf.mxu0
    %v104 = vadd.f32 0.0, %v103
    %v105 = vpop.f32.mrf.mxu0
    %106 = vdwg.mxu0
    %v107 = vadd.f32 %v51, %v101
    %v108 = vadd.f32 %v52, %v104
    %vm109 = vcmask 130048
    %110 = vst.msk [vmem:[#allocation2] sm:$0xff] %vm109, %v107
    %111 = vst.msk [vmem:[#allocation2 + $0x8] sm:$0xff] %vm109, %v108
    // Predicated region
    $region26: #{tpu_custom_call.1} parent=1 // pred_check
      %p112 = pneg %p44
    $region27: #{tpu_custom_call.1} parent=1 // pred_check_branch
      %114 = sbr.rel (%p112) target = $region29
    $region28: #{tpu_custom_call.1} parent=1 // pred_region
      %v115 = vld [vmem:[#allocation2] sm:$0xff]
      %v116 = vld [vmem:[#allocation2 + $0x8] sm:$0xff]
      %v117 = vld [vmem:[%s2] sm:$0x1]
      %v119 = vlaneseq
      %v120 = vshrl.u32 %v119, 7
      %v121 = vsub.s32 0, %v120
      %v122 = vrot.slane %v117, %v121
      %v124 = vadd.f32 %v115, %v122
      %v125 = vadd.f32 %v116, %v122
      %126 = vst.msk [vmem:[#allocation8] sm:$0xff] %vm109, %v124
      %127 = vst.msk [vmem:[#allocation8 + $0x8] sm:$0xff] %vm109, %v125
    $region29: #{tpu_custom_call.1} parent=1 // pred_fallthru
      _
    // Predicated region
    $region30: #{tpu_custom_call.1} parent=1 // pred_check
      _
    $region31: #{tpu_custom_call.1} parent=1 // pred_check_branch
      %129 = sbr.rel (0) target = $region33
    $region32: #{tpu_custom_call.1} parent=1 // pred_region
      %s131 = ssub.s32 256, 256
      %132 = vsyncadd [#allocation5], %s131
      %s133 = sshll.u32 [#allocation8], 4
      %s134 = int_to_ptr.vmem [resolvable:$true] %s133
      %139 = dma.vmem_to_hbm [thread:$0]  %s134, 256, %s3, [#allocation5], 128, 128, 8
    $region33: #{tpu_custom_call.1} parent=1 // pred_fallthru
      _
    // Predicated region
    $region34: #{tpu_custom_call.1} parent=1 // pred_check
      _
    $region35: #{tpu_custom_call.1} parent=1 // pred_check_branch
      %141 = sbr.rel (0) target = $region37
    $region36: #{tpu_custom_call.1} parent=1 // pred_region
      %142 = dma.done [#allocation5], 256
    $region37: #{tpu_custom_call.1} parent=1 // pred_fallthru
      _
    %143 = vsyncpa [#allocation4], 1
    %144 = vsyncpa [#allocation7], 1
    %145 = vsyncpa [#allocation5], 1

</llo_original>
